<compile_context>
chip_gen: v7x
topology: tpu7x:2x2x1
jax: 0.10.0
libtpu: 0.0.40
codegen_flags: <defaults>
</compile_context>

<pallas_src>
import functools

import jax
import jax.numpy as jnp
from jax import lax
from jax.experimental import pallas as pl
from jax.experimental.pallas import tpu as pltpu


# pywt db2 decomposition filters (dec_lo / dec_hi), hard-coded so the script
# is self-contained (no pywt dependency).
_DB2_DEC_LO = [-0.12940952255092145, 0.22414386804185735,
               0.836516303737469, 0.48296291314469025]
_DB2_DEC_HI = [-0.48296291314469025, 0.836516303737469,
               -0.22414386804185735, -0.12940952255092145]


def _round_up(x, mult):
    return ((x + mult - 1) // mult) * mult


def _swt_fused_kernel(x_ref, h0_ref, h1_ref, out_ref, *, m, K, L_true):
    """All m SWT levels for one block of rows, fused.

    x_ref   : (TR, L_pad)       rows = (batch, channel) folded; L on lanes
    h0_ref  : (TR, K)           per-row low-pass filters (already reversed)
    h1_ref  : (TR, K)           per-row high-pass filters (already reversed)
    out_ref : (m+1, TR, L_pad)  [approx_m, detail_m, ..., detail_1]

    L_true is the un-padded sequence length; replicate-edge clamping is done
    against L_true so the lane padding (L_pad >= L_true) never leaks into
    valid outputs.
    """
    TR, L_pad = x_ref.shape
    approx = x_ref[...].astype(jnp.float32)                      # (TR, L_pad)

    # Hoisted (level-independent): lane indices and the 2*K filter tap columns.
    lane = lax.broadcasted_iota(jnp.int32, (TR, L_pad), 1)
    h0_cols = [h0_ref[:, k:k + 1] for k in range(K)]             # each (TR, 1)
    h1_cols = [h1_ref[:, k:k + 1] for k in range(K)]

    dilation = 1
    for level in range(m):                                       # m tiny -> unrolled
        padding = dilation * (K - 1)
        pad_r = (K * dilation) // 2
        pad_l = padding - pad_r

        # Edge columns for replicate clamping (broadcast hoisted out of k loop).
        left_edge = jnp.broadcast_to(approx[:, 0:1], (TR, L_pad))
        right_edge = jnp.broadcast_to(approx[:, L_true - 1:L_true], (TR, L_pad))

        acc_a = None
        acc_d = None
        # Depthwise dilated cross-correlation (== F.conv1d with groups=C):
        #   out[r, l] = sum_k h[r, k] * approx[r, clamp(l + k*dilation - pad_l)]
        for k in range(K):                                       # K=4 -> unrolled
            off = k * dilation - pad_l
            shift = (-off) % L_pad                               # static, >= 0
            seg = pltpu.roll(approx, shift=shift, axis=1) if shift else approx
            if off > 0:                                          # right edge clamp
                seg = jnp.where(lane >= L_true - off, right_edge, seg)
            elif off < 0:                                        # left edge clamp
                seg = jnp.where(lane < -off, left_edge, seg)
            if acc_a is None:                                    # k=0 tap = init
                acc_a = h0_cols[k] * seg
                acc_d = h1_cols[k] * seg
            else:
                acc_a = acc_a + h0_cols[k] * seg
                acc_d = acc_d + h1_cols[k] * seg

        # detail of level (level+1) goes to output index m - level
        out_ref[m - level, :, :] = acc_d.astype(out_ref.dtype)
        approx = acc_a
        dilation *= 2

    out_ref[0, :, :] = approx.astype(out_ref.dtype)


def _choose_row_block(n_rows, bytes_per_row, target_bytes=1 << 20):
    """Row-tile size: multiple of 8, ~target_bytes per input tile, >=2 grid steps."""
    tr = max(8, (target_bytes // max(bytes_per_row, 1)) // 8 * 8)
    tr = min(tr, _round_up(n_rows, 8))
    # Keep at least 2 grid steps where rows allow it (v7x has 2 TensorCores/chip).
    while tr > 8 and -(-n_rows // tr) < 2:
        tr = max(8, (tr // 2) // 8 * 8)
    return tr


def swt_decompose_rows(x_rows, h0_rows, h1_rows, *, m, kernel_size, seq_len):
    """Fused m-level SWT on a lane-dense (rows, L_pad) slab.

    x_rows  : (R, L_pad) float32, rows = batch*channel, L_pad a multiple of 128
    h*_rows : (R, K)     per-row (per-channel) filters, already reversed
    Returns (m+1, R, L_pad): [approx_m, detail_m, ..., detail_1].
    """
    R, L_pad = x_rows.shape
    K = kernel_size
    TR = _choose_row_block(R, L_pad * 4)
    grid = -(-R // TR)
    R_pad = grid * TR
    if R_pad != R:  # pad rows so the row blocks tile exactly (extra rows sliced off)
        x_rows = jnp.pad(x_rows, ((0, R_pad - R), (0, 0)))
        h0_rows = jnp.pad(h0_rows, ((0, R_pad - R), (0, 0)))
        h1_rows = jnp.pad(h1_rows, ((0, R_pad - R), (0, 0)))

    kernel = functools.partial(_swt_fused_kernel, m=m, K=K, L_true=seq_len)
    out = pl.pallas_call(
        kernel,
        out_shape=jax.ShapeDtypeStruct((m + 1, R_pad, L_pad), jnp.float32),
        grid=(grid,),
        in_specs=[
            pl.BlockSpec((TR, L_pad), lambda r: (r, 0)),   # x rows (lane-dense)
            pl.BlockSpec((TR, K), lambda r: (r, 0)),       # h0 rows
            pl.BlockSpec((TR, K), lambda r: (r, 0)),       # h1 rows
        ],
        out_specs=pl.BlockSpec((m + 1, TR, L_pad), lambda r: (0, r, 0)),
        compiler_params=pltpu.CompilerParams(
            dimension_semantics=("parallel",),
            vmem_limit_bytes=32 * 1024 * 1024,
        ),
    )(x_rows, h0_rows, h1_rows)
    return out[:, :R, :]


@functools.partial(jax.jit, static_argnames=("m", "kernel_size"))
def wavelet_embedding_swt(x, h0, h1, *, m, kernel_size):
    """SWT decomposition matching WaveletEmbedding.forward (swt=True).

    x  : (B, L, d_channel) float32
    h0 : (d_channel, 1, K) low-pass  filters (PyTorch layout, already reversed)
    h1 : (d_channel, 1, K) high-pass filters (PyTorch layout, already reversed)
    returns (B, L, d_channel, m+1): [approx_m, detail_m, ..., detail_1]
    """
    B, L, C = x.shape
    K = kernel_size
    L_pad = _round_up(L, 128)

    # Layout plumbing: lane-dense (B*C, L_pad) rows.  TODO(synk): downstream
    # Q/K/V projections could consume the (m+1, B, C, L) slab directly and skip
    # both wrapper transposes; kept here for exact PyTorch output parity.
    x_rows = jnp.transpose(x, (0, 2, 1)).reshape(B * C, L).astype(jnp.float32)
    if L_pad != L:
        x_rows = jnp.pad(x_rows, ((0, 0), (0, L_pad - L)))
    h0_rows = jnp.broadcast_to(
        h0[:, 0, :].astype(jnp.float32)[None], (B, C, K)).reshape(B * C, K)
    h1_rows = jnp.broadcast_to(
        h1[:, 0, :].astype(jnp.float32)[None], (B, C, K)).reshape(B * C, K)

    slab = swt_decompose_rows(x_rows, h0_rows, h1_rows,
                              m=m, kernel_size=K, seq_len=L)   # (m+1, B*C, L_pad)
    coeffs = slab[:, :, :L].reshape(m + 1, B, C, L)
    return jnp.transpose(coeffs, (1, 3, 2, 0))                 # (B, L, C, m+1)


def _ref_swt(x, h0_ck, h1_ck, m, K):
    """Pure-JAX reference (same math, no Pallas) for a correctness check."""
    B, L, C = x.shape
    approx = x.astype(jnp.float32)
    details = []
    dilation = 1
    for _ in range(m):
        padding = dilation * (K - 1)
        pad_r = K * dilation // 2
        pad_l = padding - pad_r
        x_pad = jnp.pad(approx, ((0, 0), (pad_l, pad_r), (0, 0)), mode="edge")
        a = jnp.zeros((B, L, C), jnp.float32)
        d = jnp.zeros((B, L, C), jnp.float32)
        for k in range(K):
            seg = lax.dynamic_slice_in_dim(x_pad, k * dilation, L, axis=1)
            a = a + h0_ck[:, k][None, None, :] * seg
            d = d + h1_ck[:, k][None, None, :] * seg
        approx = a
        details.append(d)
        dilation *= 2
    return jnp.stack([approx] + list(reversed(details)), axis=-1)


if __name__ == "__main__":
    # Module defaults: d_channel=16, swt=True, wv='db2', m=2, kernel_size=None
    d_channel = 16
    m = 2
    B, L = 2, 16

    # Deterministic parameter init, same as the PyTorch __init__ with pywt:
    # h0 = dec_lo reversed, h1 = dec_hi reversed, tiled over channels.
    h0_filt = jnp.asarray(_DB2_DEC_LO[::-1], dtype=jnp.float32)   # (4,)
    h1_filt = jnp.asarray(_DB2_DEC_HI[::-1], dtype=jnp.float32)   # (4,)
    K = int(h0_filt.shape[0])
    h0 = jnp.tile(h0_filt[None, None, :], (d_channel, 1, 1))      # (C, 1, K)
    h1 = jnp.tile(h1_filt[None, None, :], (d_channel, 1, 1))      # (C, 1, K)

    key = jax.random.PRNGKey(0)
    x = jax.random.normal(key, (B, L, d_channel), dtype=jnp.float32)

    out = jax.block_until_ready(
        wavelet_embedding_swt(x, h0, h1, m=m, kernel_size=K))
    assert out.shape == (B, L, d_channel, m + 1), out.shape
    ref = _ref_swt(x, h0[:, 0, :], h1[:, 0, :], m, K)
    assert jnp.allclose(out, ref, atol=1e-5, rtol=1e-5)

    # Non-128-multiple L with perturbed per-channel filters (as after training,
    # since requires_grad=True in GeomAttentionLayer): exercises the lane
    # padding + true-length edge-clamping path.
    k1, k2, k3 = jax.random.split(jax.random.PRNGKey(1), 3)
    L2 = 96
    x2 = jax.random.normal(k1, (B, L2, d_channel), dtype=jnp.float32)
    h0p = h0 + 0.01 * jax.random.normal(k2, h0.shape, dtype=jnp.float32)
    h1p = h1 + 0.01 * jax.random.normal(k3, h1.shape, dtype=jnp.float32)
    out2 = jax.block_until_ready(
        wavelet_embedding_swt(x2, h0p, h1p, m=m, kernel_size=K))
    ref2 = _ref_swt(x2, h0p[:, 0, :], h1p[:, 0, :], m, K)
    assert jnp.allclose(out2, ref2, atol=1e-5, rtol=1e-5)

    print("KERNEL_OK")
</pallas_src>

<mosaic_0001>
module attributes {stable_mosaic.version = 11 : i64} {
  func.func @_swt_fused_kernel(%arg0: i32, %arg1: memref<16x128xf32, #tpu.memory_space<vmem>>, %arg2: memref<16x4xf32, #tpu.memory_space<vmem>>, %arg3: memref<16x4xf32, #tpu.memory_space<vmem>>, %arg4: memref<3x16x128xf32, #tpu.memory_space<vmem>>) attributes {dimension_semantics = [#tpu.dimension_semantics<parallel>], iteration_bounds = array<i64: 2>, scalar_prefetch = 0 : i64, scratch_operands = 0 : i64, tpu.core_type = #tpu.core_type<tc>, window_params = [{transform_indices = @transform_0, window_bounds = array<i64: 16, 128>}, {transform_indices = @transform_1, window_bounds = array<i64: 16, 4>}, {transform_indices = @transform_2, window_bounds = array<i64: 16, 4>}, {transform_indices = @transform_3, window_bounds = array<i64: 3, 16, 128>}]} {
    %c0 = arith.constant 0 : index
    %c0_0 = arith.constant 0 : index
    %0 = vector.load %arg1[%c0, %c0_0] : memref<16x128xf32, #tpu.memory_space<vmem>>, vector<16x128xf32>
    %1 = tpu.iota {dimensions = array<i32: 1>} : vector<16x128xi32>
    %c0_1 = arith.constant 0 : index
    %c0_2 = arith.constant 0 : index
    %2 = vector.load %arg2[%c0_1, %c0_2] : memref<16x4xf32, #tpu.memory_space<vmem>>, vector<16x1xf32>
    %c0_3 = arith.constant 0 : index
    %c1 = arith.constant 1 : index
    %3 = vector.load %arg2[%c0_3, %c1] : memref<16x4xf32, #tpu.memory_space<vmem>>, vector<16x1xf32>
    %c0_4 = arith.constant 0 : index
    %c2 = arith.constant 2 : index
    %4 = vector.load %arg2[%c0_4, %c2] : memref<16x4xf32, #tpu.memory_space<vmem>>, vector<16x1xf32>
    %c0_5 = arith.constant 0 : index
    %c3 = arith.constant 3 : index
    %5 = vector.load %arg2[%c0_5, %c3] : memref<16x4xf32, #tpu.memory_space<vmem>>, vector<16x1xf32>
    %c0_6 = arith.constant 0 : index
    %c0_7 = arith.constant 0 : index
    %6 = vector.load %arg3[%c0_6, %c0_7] : memref<16x4xf32, #tpu.memory_space<vmem>>, vector<16x1xf32>
    %c0_8 = arith.constant 0 : index
    %c1_9 = arith.constant 1 : index
    %7 = vector.load %arg3[%c0_8, %c1_9] : memref<16x4xf32, #tpu.memory_space<vmem>>, vector<16x1xf32>
    %c0_10 = arith.constant 0 : index
    %c2_11 = arith.constant 2 : index
    %8 = vector.load %arg3[%c0_10, %c2_11] : memref<16x4xf32, #tpu.memory_space<vmem>>, vector<16x1xf32>
    %c0_12 = arith.constant 0 : index
    %c3_13 = arith.constant 3 : index
    %9 = vector.load %arg3[%c0_12, %c3_13] : memref<16x4xf32, #tpu.memory_space<vmem>>, vector<16x1xf32>
    %10 = vector.extract_strided_slice %0 {offsets = [0, 0], sizes = [16, 1], strides = [1, 1]} : vector<16x128xf32> to vector<16x1xf32>
    %11 = vector.shape_cast %10 : vector<16x1xf32> to vector<16x1xf32>
    %12 = vector.broadcast %11 : vector<16x1xf32> to vector<16x128xf32>
    %13 = vector.extract_strided_slice %0 {offsets = [0, 15], sizes = [16, 1], strides = [1, 1]} : vector<16x128xf32> to vector<16x1xf32>
    %14 = vector.shape_cast %13 : vector<16x1xf32> to vector<16x1xf32>
    %15 = vector.broadcast %14 : vector<16x1xf32> to vector<16x128xf32>
    %c1_i32 = arith.constant 1 : i32
    %16 = tpu.dynamic_rotate %0 by %c1_i32 dim 1 : vector<16x128xf32>, i32 -> vector<16x128xf32>
    %c1_i32_14 = arith.constant 1 : i32
    %17 = vector.broadcast %c1_i32_14 : i32 to vector<16x128xi32>
    %18 = arith.cmpi slt, %1, %17 : vector<16x128xi32>
    %19 = arith.select %18, %12, %16 : vector<16x128xi1>, vector<16x128xf32>
    %20 = vector.broadcast %2 : vector<16x1xf32> to vector<16x128xf32>
    %21 = arith.mulf %20, %19 : vector<16x128xf32>
    %22 = vector.broadcast %6 : vector<16x1xf32> to vector<16x128xf32>
    %23 = arith.mulf %22, %19 : vector<16x128xf32>
    %24 = vector.broadcast %3 : vector<16x1xf32> to vector<16x128xf32>
    %25 = arith.mulf %24, %0 : vector<16x128xf32>
    %26 = arith.addf %21, %25 : vector<16x128xf32>
    %27 = vector.broadcast %7 : vector<16x1xf32> to vector<16x128xf32>
    %28 = arith.mulf %27, %0 : vector<16x128xf32>
    %29 = arith.addf %23, %28 : vector<16x128xf32>
    %c127_i32 = arith.constant 127 : i32
    %30 = tpu.dynamic_rotate %0 by %c127_i32 dim 1 : vector<16x128xf32>, i32 -> vector<16x128xf32>
    %c15_i32 = arith.constant 15 : i32
    %31 = vector.broadcast %c15_i32 : i32 to vector<16x128xi32>
    %32 = arith.cmpi sge, %1, %31 : vector<16x128xi32>
    %33 = arith.select %32, %15, %30 : vector<16x128xi1>, vector<16x128xf32>
    %34 = vector.broadcast %4 : vector<16x1xf32> to vector<16x128xf32>
    %35 = arith.mulf %34, %33 : vector<16x128xf32>
    %36 = arith.addf %26, %35 : vector<16x128xf32>
    %37 = vector.broadcast %8 : vector<16x1xf32> to vector<16x128xf32>
    %38 = arith.mulf %37, %33 : vector<16x128xf32>
    %39 = arith.addf %29, %38 : vector<16x128xf32>
    %c126_i32 = arith.constant 126 : i32
    %40 = tpu.dynamic_rotate %0 by %c126_i32 dim 1 : vector<16x128xf32>, i32 -> vector<16x128xf32>
    %c14_i32 = arith.constant 14 : i32
    %41 = vector.broadcast %c14_i32 : i32 to vector<16x128xi32>
    %42 = arith.cmpi sge, %1, %41 : vector<16x128xi32>
    %43 = arith.select %42, %15, %40 : vector<16x128xi1>, vector<16x128xf32>
    %44 = vector.broadcast %5 : vector<16x1xf32> to vector<16x128xf32>
    %45 = arith.mulf %44, %43 : vector<16x128xf32>
    %46 = arith.addf %36, %45 : vector<16x128xf32>
    %47 = vector.broadcast %9 : vector<16x1xf32> to vector<16x128xf32>
    %48 = arith.mulf %47, %43 : vector<16x128xf32>
    %49 = arith.addf %39, %48 : vector<16x128xf32>
    %c2_15 = arith.constant 2 : index
    %c0_16 = arith.constant 0 : index
    %c0_17 = arith.constant 0 : index
    %50 = vector.load %arg4[%c2_15, %c0_16, %c0_17] : memref<3x16x128xf32, #tpu.memory_space<vmem>>, vector<1x16x128xf32>
    %51 = vector.shape_cast %50 : vector<1x16x128xf32> to vector<16x128xf32>
    %52 = vector.shape_cast %49 : vector<16x128xf32> to vector<1x16x128xf32>
    tpu.vector_store %arg4[%c2_15, %c0_16, %c0_17], %52 {strides = array<i32>} : memref<3x16x128xf32, #tpu.memory_space<vmem>>, vector<1x16x128xf32>,
    %53 = vector.extract_strided_slice %46 {offsets = [0, 0], sizes = [16, 1], strides = [1, 1]} : vector<16x128xf32> to vector<16x1xf32>
    %54 = vector.shape_cast %53 : vector<16x1xf32> to vector<16x1xf32>
    %55 = vector.broadcast %54 : vector<16x1xf32> to vector<16x128xf32>
    %56 = vector.extract_strided_slice %46 {offsets = [0, 15], sizes = [16, 1], strides = [1, 1]} : vector<16x128xf32> to vector<16x1xf32>
    %57 = vector.shape_cast %56 : vector<16x1xf32> to vector<16x1xf32>
    %58 = vector.broadcast %57 : vector<16x1xf32> to vector<16x128xf32>
    %c2_i32 = arith.constant 2 : i32
    %59 = tpu.dynamic_rotate %46 by %c2_i32 dim 1 : vector<16x128xf32>, i32 -> vector<16x128xf32>
    %c2_i32_18 = arith.constant 2 : i32
    %60 = vector.broadcast %c2_i32_18 : i32 to vector<16x128xi32>
    %61 = arith.cmpi slt, %1, %60 : vector<16x128xi32>
    %62 = arith.select %61, %55, %59 : vector<16x128xi1>, vector<16x128xf32>
    %63 = vector.broadcast %2 : vector<16x1xf32> to vector<16x128xf32>
    %64 = arith.mulf %63, %62 : vector<16x128xf32>
    %65 = vector.broadcast %6 : vector<16x1xf32> to vector<16x128xf32>
    %66 = arith.mulf %65, %62 : vector<16x128xf32>
    %67 = vector.broadcast %3 : vector<16x1xf32> to vector<16x128xf32>
    %68 = arith.mulf %67, %46 : vector<16x128xf32>
    %69 = arith.addf %64, %68 : vector<16x128xf32>
    %70 = vector.broadcast %7 : vector<16x1xf32> to vector<16x128xf32>
    %71 = arith.mulf %70, %46 : vector<16x128xf32>
    %72 = arith.addf %66, %71 : vector<16x128xf32>
    %c126_i32_19 = arith.constant 126 : i32
    %73 = tpu.dynamic_rotate %46 by %c126_i32_19 dim 1 : vector<16x128xf32>, i32 -> vector<16x128xf32>
    %c14_i32_20 = arith.constant 14 : i32
    %74 = vector.broadcast %c14_i32_20 : i32 to vector<16x128xi32>
    %75 = arith.cmpi sge, %1, %74 : vector<16x128xi32>
    %76 = arith.select %75, %58, %73 : vector<16x128xi1>, vector<16x128xf32>
    %77 = vector.broadcast %4 : vector<16x1xf32> to vector<16x128xf32>
    %78 = arith.mulf %77, %76 : vector<16x128xf32>
    %79 = arith.addf %69, %78 : vector<16x128xf32>
    %80 = vector.broadcast %8 : vector<16x1xf32> to vector<16x128xf32>
    %81 = arith.mulf %80, %76 : vector<16x128xf32>
    %82 = arith.addf %72, %81 : vector<16x128xf32>
    %c124_i32 = arith.constant 124 : i32
    %83 = tpu.dynamic_rotate %46 by %c124_i32 dim 1 : vector<16x128xf32>, i32 -> vector<16x128xf32>
    %c12_i32 = arith.constant 12 : i32
    %84 = vector.broadcast %c12_i32 : i32 to vector<16x128xi32>
    %85 = arith.cmpi sge, %1, %84 : vector<16x128xi32>
    %86 = arith.select %85, %58, %83 : vector<16x128xi1>, vector<16x128xf32>
    %87 = vector.broadcast %5 : vector<16x1xf32> to vector<16x128xf32>
    %88 = arith.mulf %87, %86 : vector<16x128xf32>
    %89 = arith.addf %79, %88 : vector<16x128xf32>
    %90 = vector.broadcast %9 : vector<16x1xf32> to vector<16x128xf32>
    %91 = arith.mulf %90, %86 : vector<16x128xf32>
    %92 = arith.addf %82, %91 : vector<16x128xf32>
    %c1_21 = arith.constant 1 : index
    %c0_22 = arith.constant 0 : index
    %c0_23 = arith.constant 0 : index
    %93 = vector.load %arg4[%c1_21, %c0_22, %c0_23] : memref<3x16x128xf32, #tpu.memory_space<vmem>>, vector<1x16x128xf32>
    %94 = vector.shape_cast %93 : vector<1x16x128xf32> to vector<16x128xf32>
    %95 = vector.shape_cast %92 : vector<16x128xf32> to vector<1x16x128xf32>
    tpu.vector_store %arg4[%c1_21, %c0_22, %c0_23], %95 {strides = array<i32>} : memref<3x16x128xf32, #tpu.memory_space<vmem>>, vector<1x16x128xf32>,
    %c0_24 = arith.constant 0 : index
    %c0_25 = arith.constant 0 : index
    %c0_26 = arith.constant 0 : index
    %96 = vector.load %arg4[%c0_24, %c0_25, %c0_26] : memref<3x16x128xf32, #tpu.memory_space<vmem>>, vector<1x16x128xf32>
    %97 = vector.shape_cast %96 : vector<1x16x128xf32> to vector<16x128xf32>
    %98 = vector.shape_cast %89 : vector<16x128xf32> to vector<1x16x128xf32>
    tpu.vector_store %arg4[%c0_24, %c0_25, %c0_26], %98 {strides = array<i32>} : memref<3x16x128xf32, #tpu.memory_space<vmem>>, vector<1x16x128xf32>,
    return
  }
  func.func @transform_0(%arg0: i32) -> (i32, i32) {
    %c0_i32 = arith.constant 0 : i32
    %c0_i32_0 = arith.constant 0 : i32
    return %arg0, %c0_i32 : i32, i32
  }
  func.func @transform_1(%arg0: i32) -> (i32, i32) {
    %c0_i32 = arith.constant 0 : i32
    %c0_i32_0 = arith.constant 0 : i32
    return %arg0, %c0_i32 : i32, i32
  }
  func.func @transform_2(%arg0: i32) -> (i32, i32) {
    %c0_i32 = arith.constant 0 : i32
    %c0_i32_0 = arith.constant 0 : i32
    return %arg0, %c0_i32 : i32, i32
  }
  func.func @transform_3(%arg0: i32) -> (i32, i32, i32) {
    %c0_i32 = arith.constant 0 : i32
    %c0_i32_0 = arith.constant 0 : i32
    %c0_i32_1 = arith.constant 0 : i32
    return %c0_i32, %arg0, %c0_i32_0 : i32, i32, i32
  }
}

</mosaic_0001>

<llo_original>
// kernel: wavelet_embedding_swt.1
$region0: #{wavelet_embedding_swt.1}
  #allocation0 [shape = 'u32[]', space=smem, size = 0x4, offset = 0x4, fixed_abs, tag = 'smem constant byte address 0x4 - core index']
  #allocation1 [shape = 'u32[144,128]{1,0:T(1,128)}', space=vmem, size = 0x12000, scoped, tag = 'internal scratch']
  %s0 = inlined_call_operand.vmem [shape: f32[32,128], index: 0, kind: input, shape index: {}]
  %s1 = inlined_call_operand.vmem [shape: f32[32,4], index: 1, kind: input, shape index: {}]
  %s2 = inlined_call_operand.vmem [shape: f32[32,4], index: 2, kind: input, shape index: {}]
  %s3 = inlined_call_operand.vmem [shape: f32[3,32,128], index: 3, kind: output, shape index: {}]
  %s4 = sld [smem:[#allocation0]]
  $region79: #{wavelet_embedding_swt.1} parent=0
    _
  %s6 = ssub.s32 1, %s4
  %s7 = scalar_select 0, %s6, %s4
  $region1: #{wavelet_embedding_swt.1} parent=0
    #allocation2 [shape = 'u8[49152]{0}', space=vmem, size = 0xc000, scoped, tag = 'output window, operand 0']
    loop: start=0, step=1, limit=4
    $region2: #{wavelet_embedding_swt.1} parent=1 // loop_pre_header
      _
    $region3: #{wavelet_embedding_swt.1} parent=1 // loop_header
      %s9 = sphi 0, %s13
      %p10 = scmp.ge.s32.totalorder %s9, 4
      %s19 = sphi 0, %s21
      %s22 = sphi 0, %s19
      %s23 = sphi 0, %s22
      %s39 = sphi 0, %s23
      %s45 = sphi 0, %s47
      %s48 = sphi 0, %s45
      %s49 = sphi 0, %s48
      %s65 = sphi 0, %s49
      %s71 = sphi 0, %s73
      %s74 = sphi 0, %s71
      %s75 = sphi 0, %s74
      %s91 = sphi 0, %s75
      %s97 = sphi 0, %s99
      %s100 = sphi 0, %s97
      %s101 = sphi 0, %s100
      %s117 = sphi 0, %s101
    $region4: #{wavelet_embedding_swt.1} parent=1 // loop_header_branch
      %12 = sbr.rel (%p10) target = $region8
    $region5: #{wavelet_embedding_swt.1} parent=1 // loop_body
      %s14 = ssub.s32 %s9, 1
      %s15 = ssub.s32 %s9, 2
      %s16 = sadd.s32 %s9, 1
      %s17 = ssub.s32 %s9, %s16
      %p18 = scmp.eq.s32.totalorder %s17, 0
      %s20 = sadd.s32 %s19, 1
      %s21 = scalar_select %p18, %s19, %s20
      %p24 = pneg %p18
      %p25 = scmp.eq.s32.totalorder %s9, 1
      %p26 = por %p24, %p25
      %p27 = scmp.ne.s32.totalorder %s19, %s22
      %p28 = scmp.eq.s32.totalorder %s9, 0
      %p29 = por %p27, %p28
      %p30 = scmp.ne.s32.totalorder %s19, %s22
      %p31 = scmp.eq.s32.totalorder %s14, 1
      %p32 = por %p30, %p31
      %p33 = scmp.ne.s32.totalorder %s22, %s23
      %p34 = scmp.eq.s32.totalorder %s14, 0
      %p35 = por %p33, %p34
      %p36 = scmp.ne.s32.totalorder %s22, %s23
      %p37 = scmp.eq.s32.totalorder %s15, 1
      %p38 = por %p36, %p37
      %p40 = scmp.ne.s32.totalorder %s23, %s39
      %p41 = scmp.eq.s32.totalorder %s15, 0
      %p42 = por %p40, %p41
      %s43 = ssub.s32 %s9, %s16
      %p44 = scmp.eq.s32.totalorder %s43, 0
      %s46 = sadd.s32 %s45, 1
      %s47 = scalar_select %p44, %s45, %s46
      %p50 = pneg %p44
      %p51 = scmp.eq.s32.totalorder %s9, 1
      %p52 = por %p50, %p51
      %p53 = scmp.ne.s32.totalorder %s45, %s48
      %p54 = scmp.eq.s32.totalorder %s9, 0
      %p55 = por %p53, %p54
      %p56 = scmp.ne.s32.totalorder %s45, %s48
      %p57 = scmp.eq.s32.totalorder %s14, 1
      %p58 = por %p56, %p57
      %p59 = scmp.ne.s32.totalorder %s48, %s49
      %p60 = scmp.eq.s32.totalorder %s14, 0
      %p61 = por %p59, %p60
      %p62 = scmp.ne.s32.totalorder %s48, %s49
      %p63 = scmp.eq.s32.totalorder %s15, 1
      %p64 = por %p62, %p63
      %p66 = scmp.ne.s32.totalorder %s49, %s65
      %p67 = scmp.eq.s32.totalorder %s15, 0
      %p68 = por %p66, %p67
      %s69 = ssub.s32 %s9, %s16
      %p70 = scmp.eq.s32.totalorder %s69, 0
      %s72 = sadd.s32 %s71, 1
      %s73 = scalar_select %p70, %s71, %s72
      %p76 = pneg %p70
      %p77 = scmp.eq.s32.totalorder %s9, 1
      %p78 = por %p76, %p77
      %p79 = scmp.ne.s32.totalorder %s71, %s74
      %p80 = scmp.eq.s32.totalorder %s9, 0
      %p81 = por %p79, %p80
      %p82 = scmp.ne.s32.totalorder %s71, %s74
      %p83 = scmp.eq.s32.totalorder %s14, 1
      %p84 = por %p82, %p83
      %p85 = scmp.ne.s32.totalorder %s74, %s75
      %p86 = scmp.eq.s32.totalorder %s14, 0
      %p87 = por %p85, %p86
      %p88 = scmp.ne.s32.totalorder %s74, %s75
      %p89 = scmp.eq.s32.totalorder %s15, 1
      %p90 = por %p88, %p89
      %p92 = scmp.ne.s32.totalorder %s75, %s91
      %p93 = scmp.eq.s32.totalorder %s15, 0
      %p94 = por %p92, %p93
      %s95 = ssub.s32 %s9, %s16
      %p96 = scmp.eq.s32.totalorder %s95, 0
      %s98 = sadd.s32 %s97, 1
      %s99 = scalar_select %p96, %s97, %s98
      %p102 = pneg %p96
      %p103 = scmp.eq.s32.totalorder %s9, 1
      %p104 = por %p102, %p103
      %p105 = scmp.ne.s32.totalorder %s97, %s100
      %p106 = scmp.eq.s32.totalorder %s9, 0
      %p107 = por %p105, %p106
      %p108 = scmp.ne.s32.totalorder %s97, %s100
      %p109 = scmp.eq.s32.totalorder %s14, 1
      %p110 = por %p108, %p109
      %p111 = scmp.ne.s32.totalorder %s100, %s101
      %p112 = scmp.eq.s32.totalorder %s14, 0
      %p113 = por %p111, %p112
      %p114 = scmp.ne.s32.totalorder %s100, %s101
      %p115 = scmp.eq.s32.totalorder %s15, 1
      %p116 = por %p114, %p115
      %p118 = scmp.ne.s32.totalorder %s101, %s117
      %p119 = scmp.eq.s32.totalorder %s15, 0
      %p120 = por %p118, %p119
      %p121 = scmp.le.s32.totalorder 1, %s9
      %p122 = scmp.lt.s32.totalorder %s9, 3
      %p123 = pnand %p121, %p122
      %p124 = pneg %p123
      // Predicated region
      $region9: #{wavelet_embedding_swt.1} parent=5 // pred_check
        _
      $region10: #{wavelet_embedding_swt.1} parent=5 // pred_check_branch
        %126 = sbr.rel (%p123) target = $region12
      $region11: #{wavelet_embedding_swt.1} parent=5 // pred_region
        %s127 = ssub.s32 %s9, 1
      $region12: #{wavelet_embedding_swt.1} parent=5 // pred_fallthru
        _
      %p128 = scmp.lt.s32.totalorder %s9, 2
      // Predicated region
      $region13: #{wavelet_embedding_swt.1} parent=5 // pred_check
        %p129 = pneg %p128
      $region14: #{wavelet_embedding_swt.1} parent=5 // pred_check_branch
        %131 = sbr.rel (%p129) target = $region16
      $region15: #{wavelet_embedding_swt.1} parent=5 // pred_region
        // Predicated region
        $region17: #{wavelet_embedding_swt.1} parent=15 // pred_check
          %p132 = pneg %p29
        $region18: #{wavelet_embedding_swt.1} parent=15 // pred_check_branch
          %134 = sbr.rel (%p132) target = $region20
        $region19: #{wavelet_embedding_swt.1} parent=15 // pred_region
          %s135 = smul.u32 2, %s9
          %p136 = scmp.lt.s32.totalorder %s135, 3
          %s137 = scalar_select %p136, %s135, 3
          %s138 = smul.addr %s137, 8
          %s139 = scalar_lea.vmem %s0, %s138
          %s140 = smul.u32 2, %s9
        $region20: #{wavelet_embedding_swt.1} parent=15 // pred_fallthru
          _
        // Predicated region
        $region21: #{wavelet_embedding_swt.1} parent=15 // pred_check
          %p141 = pneg %p55
        $region22: #{wavelet_embedding_swt.1} parent=15 // pred_check_branch
          %143 = sbr.rel (%p141) target = $region24
        $region23: #{wavelet_embedding_swt.1} parent=15 // pred_region
          %s144 = smul.u32 2, %s9
          %p145 = scmp.lt.s32.totalorder %s144, 3
          %s146 = scalar_select %p145, %s144, 3
          %s147 = smul.addr %s146, 8
          %s148 = scalar_lea.vmem %s1, %s147
          %s149 = smul.u32 2, %s9
        $region24: #{wavelet_embedding_swt.1} parent=15 // pred_fallthru
          _
        // Predicated region
        $region25: #{wavelet_embedding_swt.1} parent=15 // pred_check
          %p150 = pneg %p81
        $region26: #{wavelet_embedding_swt.1} parent=15 // pred_check_branch
          %152 = sbr.rel (%p150) target = $region28
        $region27: #{wavelet_embedding_swt.1} parent=15 // pred_region
          %s153 = smul.u32 2, %s9
          %p154 = scmp.lt.s32.totalorder %s153, 3
          %s155 = scalar_select %p154, %s153, 3
          %s156 = smul.addr %s155, 8
          %s157 = scalar_lea.vmem %s2, %s156
          %s158 = smul.u32 2, %s9
        $region28: #{wavelet_embedding_swt.1} parent=15 // pred_fallthru
          _
      $region16: #{wavelet_embedding_swt.1} parent=5 // pred_fallthru
        _
      %p159 = scmp.le.s32.totalorder 1, %s9
      %p160 = scmp.lt.s32.totalorder %s9, 3
      %p161 = pnand %p159, %p160
      %p162 = pneg %p161
      // Predicated region
      $region29: #{wavelet_embedding_swt.1} parent=5 // pred_check
        _
      $region30: #{wavelet_embedding_swt.1} parent=5 // pred_check_branch
        %164 = sbr.rel (%p161) target = $region32
      $region31: #{wavelet_embedding_swt.1} parent=5 // pred_region
        %s165 = ssub.s32 %s9, 1
        %s166 = smul.u32 2, %s14
        %p167 = scmp.lt.s32.totalorder %s166, 3
        %s168 = scalar_select %p167, %s166, 3
        %s169 = smul.addr %s168, 8
        %s170 = scalar_lea.vmem %s0, %s169
        %p171 = pneg %p35
        %p172 = pneg %p32
        %s173 = smul.u32 2, %s14
        %p174 = scmp.lt.s32.totalorder %s173, 3
        %s175 = scalar_select %p174, %s173, 3
        %s176 = smul.addr %s175, 8
        %s177 = scalar_lea.vmem %s1, %s176
        %p178 = pneg %p61
        %p179 = pneg %p58
        %s180 = smul.u32 2, %s14
        %p181 = scmp.lt.s32.totalorder %s180, 3
        %s182 = scalar_select %p181, %s180, 3
        %s183 = smul.addr %s182, 8
        %s184 = scalar_lea.vmem %s2, %s183
        %p185 = pneg %p87
        %p186 = pneg %p84
        %p187 = pneg %p113
        %p188 = pneg %p110
        %s189 = sand.u32 %s100, 1
        %s190 = sand.u32 %s100, 1
        %s191 = smul.addr %s190, 48
        %s192 = scalar_lea.vmem [#allocation2], %s191
        %s193 = smul.u32 2, %s14
        %p194 = scmp.lt.s32.totalorder %s193, 3
        %s195 = scalar_select %p194, %s193, 3
        %s196 = smul.addr %s195, 8
        %s197 = scalar_lea.vmem %s0, %s196
        %s198 = smul.u32 2, %s14
        %s199 = smul.u32 2, %s14
        %p200 = scmp.lt.s32.totalorder %s199, 3
        %s201 = scalar_select %p200, %s199, 3
        %s202 = smul.addr %s201, 8
        %s203 = scalar_lea.vmem %s1, %s202
        %s204 = smul.u32 2, %s14
        %s205 = smul.u32 2, %s14
        %p206 = scmp.lt.s32.totalorder %s205, 3
        %s207 = scalar_select %p206, %s205, 3
        %s208 = smul.addr %s207, 8
        %s209 = scalar_lea.vmem %s2, %s208
        %s210 = smul.u32 2, %s14
        %s211 = smul.u32 2, %s14
        %v212 = vld [vmem:[%s197] sm:$0xff]
        %v213 = vld [vmem:[%s197 + $0x8] sm:$0xff]
        %v214 = vlaneseq
        %v215 = vand.u32 %v214, 127
        %v216 = vld [vmem:[%s203] sm:$0xff]
        %v217 = vld [vmem:[%s203 + $0x8] sm:$0xff]
        %v218 = vld [vmem:[%s209] sm:$0xff]
        %v219 = vld [vmem:[%s209 + $0x8] sm:$0xff]
        %221 = vset.pattern.permute.xlu0 0
        %222 = vperm.xlu0 %221, %v212
        %v223 = vpop.permute.xlu0 %222
        %226 = vset.pattern.permute.xlu0 0
        %227 = vperm.xlu0 %226, %v213
        %v228 = vpop.permute.xlu0 %227
        %230 = vset.pattern.permute.xlu0 15
        %231 = vperm.xlu0 %230, %v212
        %v232 = vpop.permute.xlu0 %231
        %234 = vset.pattern.permute.xlu0 15
        %235 = vperm.xlu0 %234, %v213
        %v236 = vpop.permute.xlu0 %235
        %238 = vrot.lane.b32.xlu0 %v212, 1
        %v239 = vpop.permute.xlu0 %238
        %240 = vrot.lane.b32.xlu0 %v213, 1
        %v241 = vpop.permute.xlu0 %240
        %vm242 = vcmp.lt.s32.totalorder %v215, 1
        %v243 = vsel %vm242, %v223, %v239
        %v244 = vsel %vm242, %v228, %v241
        %246 = vset.pattern.permute.xlu0 0
        %247 = vperm.xlu0 %246, %v216
        %v248 = vpop.permute.xlu0 %247
        %251 = vset.pattern.permute.xlu0 0
        %252 = vperm.xlu0 %251, %v217
        %v253 = vpop.permute.xlu0 %252
        %v255 = vmul.f32 %v248, %v243
        %v256 = vmul.f32 %v253, %v244
        %258 = vset.pattern.permute.xlu0 0
        %259 = vperm.xlu0 %258, %v218
        %v260 = vpop.permute.xlu0 %259
        %263 = vset.pattern.permute.xlu0 0
        %264 = vperm.xlu0 %263, %v219
        %v265 = vpop.permute.xlu0 %264
        %v267 = vmul.f32 %v260, %v243
        %v268 = vmul.f32 %v265, %v244
        %269 = vset.pattern.permute.xlu0 1
        %270 = vperm.xlu0 %269, %v216
        %v271 = vpop.permute.xlu0 %270
        %273 = vset.pattern.permute.xlu0 1
        %274 = vperm.xlu0 %273, %v217
        %v275 = vpop.permute.xlu0 %274
        %v277 = vmul.f32 %v271, %v212
        %v278 = vmul.f32 %v275, %v213
        %v279 = vadd.f32 %v255, %v277
        %v280 = vadd.f32 %v256, %v278
        %281 = vset.pattern.permute.xlu0 1
        %282 = vperm.xlu0 %281, %v218
        %v283 = vpop.permute.xlu0 %282
        %285 = vset.pattern.permute.xlu0 1
        %286 = vperm.xlu0 %285, %v219
        %v287 = vpop.permute.xlu0 %286
        %v289 = vmul.f32 %v283, %v212
        %v290 = vmul.f32 %v287, %v213
        %v291 = vadd.f32 %v267, %v289
        %v292 = vadd.f32 %v268, %v290
        %293 = vrot.lane.b32.xlu0 %v212, 127
        %v294 = vpop.permute.xlu0 %293
        %295 = vrot.lane.b32.xlu0 %v213, 127
        %v296 = vpop.permute.xlu0 %295
        %vm297 = vcmp.ge.s32.totalorder %v215, 15
        %v298 = vsel %vm297, %v232, %v294
        %v299 = vsel %vm297, %v236, %v296
        %300 = vset.pattern.permute.xlu0 2
        %301 = vperm.xlu0 %300, %v216
        %v302 = vpop.permute.xlu0 %301
        %304 = vset.pattern.permute.xlu0 2
        %305 = vperm.xlu0 %304, %v217
        %v306 = vpop.permute.xlu0 %305
        %v308 = vmul.f32 %v302, %v298
        %v309 = vmul.f32 %v306, %v299
        %v310 = vadd.f32 %v279, %v308
        %v311 = vadd.f32 %v280, %v309
        %312 = vset.pattern.permute.xlu0 2
        %313 = vperm.xlu0 %312, %v218
        %v314 = vpop.permute.xlu0 %313
        %316 = vset.pattern.permute.xlu0 2
        %317 = vperm.xlu0 %316, %v219
        %v318 = vpop.permute.xlu0 %317
        %v320 = vmul.f32 %v314, %v298
        %v321 = vmul.f32 %v318, %v299
        %v322 = vadd.f32 %v291, %v320
        %v323 = vadd.f32 %v292, %v321
        %324 = vrot.lane.b32.xlu0 %v212, 126
        %v325 = vpop.permute.xlu0 %324
        %326 = vrot.lane.b32.xlu0 %v213, 126
        %v327 = vpop.permute.xlu0 %326
        %vm328 = vcmp.ge.s32.totalorder %v215, 14
        %v329 = vsel %vm328, %v232, %v325
        %v330 = vsel %vm328, %v236, %v327
        %331 = vset.pattern.permute.xlu0 3
        %332 = vperm.xlu0 %331, %v216
        %v333 = vpop.permute.xlu0 %332
        %335 = vset.pattern.permute.xlu0 3
        %336 = vperm.xlu0 %335, %v217
        %v337 = vpop.permute.xlu0 %336
        %v339 = vmul.f32 %v333, %v329
        %v340 = vmul.f32 %v337, %v330
        %v341 = vadd.f32 %v310, %v339
        %v342 = vadd.f32 %v311, %v340
        %343 = vset.pattern.permute.xlu0 3
        %344 = vperm.xlu0 %343, %v218
        %v345 = vpop.permute.xlu0 %344
        %347 = vset.pattern.permute.xlu0 3
        %348 = vperm.xlu0 %347, %v219
        %v349 = vpop.permute.xlu0 %348
        %v351 = vmul.f32 %v345, %v329
        %v352 = vmul.f32 %v349, %v330
        %v353 = vadd.f32 %v322, %v351
        %v354 = vadd.f32 %v323, %v352
        %s355 = scalar_lea.vmem %s192, 32 [#allocation2]
        %356 = vst [vmem:[%s355] sm:$0xff] %v353
        %357 = vst [vmem:[%s355 + $0x8] sm:$0xff] %v354
        %359 = vset.pattern.permute.xlu0 0
        %360 = vperm.xlu0 %359, %v341
        %v361 = vpop.permute.xlu0 %360
        %364 = vset.pattern.permute.xlu0 0
        %365 = vperm.xlu0 %364, %v342
        %v366 = vpop.permute.xlu0 %365
        %368 = vset.pattern.permute.xlu0 15
        %369 = vperm.xlu0 %368, %v341
        %v370 = vpop.permute.xlu0 %369
        %372 = vset.pattern.permute.xlu0 15
        %373 = vperm.xlu0 %372, %v342
        %v374 = vpop.permute.xlu0 %373
        %376 = vrot.lane.b32.xlu0 %v341, 2
        %v377 = vpop.permute.xlu0 %376
        %378 = vrot.lane.b32.xlu0 %v342, 2
        %v379 = vpop.permute.xlu0 %378
        %vm380 = vcmp.lt.s32.totalorder %v215, 2
        %v381 = vsel %vm380, %v361, %v377
        %v382 = vsel %vm380, %v366, %v379
        %v383 = vmul.f32 %v248, %v381
        %v384 = vmul.f32 %v253, %v382
        %v385 = vmul.f32 %v260, %v381
        %v386 = vmul.f32 %v265, %v382
        %v387 = vmul.f32 %v271, %v341
        %v388 = vmul.f32 %v275, %v342
        %v389 = vadd.f32 %v383, %v387
        %v390 = vadd.f32 %v384, %v388
        %v391 = vmul.f32 %v283, %v341
        %v392 = vmul.f32 %v287, %v342
        %v393 = vadd.f32 %v385, %v391
        %v394 = vadd.f32 %v386, %v392
        %395 = vrot.lane.b32.xlu0 %v341, 126
        %v396 = vpop.permute.xlu0 %395
        %397 = vrot.lane.b32.xlu0 %v342, 126
        %v398 = vpop.permute.xlu0 %397
        %v399 = vsel %vm328, %v370, %v396
        %v400 = vsel %vm328, %v374, %v398
        %v401 = vmul.f32 %v302, %v399
        %v402 = vmul.f32 %v306, %v400
        %v403 = vadd.f32 %v389, %v401
        %v404 = vadd.f32 %v390, %v402
        %v405 = vmul.f32 %v314, %v399
        %v406 = vmul.f32 %v318, %v400
        %v407 = vadd.f32 %v393, %v405
        %v408 = vadd.f32 %v394, %v406
        %409 = vrot.lane.b32.xlu0 %v341, 124
        %v410 = vpop.permute.xlu0 %409
        %411 = vrot.lane.b32.xlu0 %v342, 124
        %v412 = vpop.permute.xlu0 %411
        %vm413 = vcmp.ge.s32.totalorder %v215, 12
        %v414 = vsel %vm413, %v370, %v410
        %v415 = vsel %vm413, %v374, %v412
        %v416 = vmul.f32 %v333, %v414
        %v417 = vmul.f32 %v337, %v415
        %v418 = vadd.f32 %v403, %v416
        %v419 = vadd.f32 %v404, %v417
        %v420 = vmul.f32 %v345, %v414
        %v421 = vmul.f32 %v349, %v415
        %v422 = vadd.f32 %v407, %v420
        %v423 = vadd.f32 %v408, %v421
        %s424 = scalar_lea.vmem %s192, 16 [#allocation2]
        %425 = vst [vmem:[%s424] sm:$0xff] %v422
        %426 = vst [vmem:[%s424 + $0x8] sm:$0xff] %v423
        %427 = vst [vmem:[%s192] sm:$0xff] %v418
        %428 = vst [vmem:[%s192 + $0x8] sm:$0xff] %v419
        %s429 = sand.u32 %s100, 1
        %s430 = sand.u32 %s100, 1
        %s431 = smul.addr %s430, 48
        %s432 = scalar_lea.vmem [#allocation2], %s431
        // Predicated region
        $region33: #{wavelet_embedding_swt.1} parent=31 // pred_check
          %p433 = pneg %p110
        $region34: #{wavelet_embedding_swt.1} parent=31 // pred_check_branch
          %435 = sbr.rel (%p433) target = $region36
        $region35: #{wavelet_embedding_swt.1} parent=31 // pred_region
          %s436 = smul.u32 2, %s14
          %s437 = smul.addr %s436, 8
          %s438 = scalar_lea.vmem %s3, %s437
          // Predicated region
          $region37: #{wavelet_embedding_swt.1} parent=35 // pred_check
            _
          $region38: #{wavelet_embedding_swt.1} parent=35 // pred_check_branch
            %440 = sbr.rel (0) target = $region40
          $region39: #{wavelet_embedding_swt.1} parent=35 // pred_region
            // Predicated region
            $region41: #{wavelet_embedding_swt.1} parent=39 // pred_check
              _
            $region42: #{wavelet_embedding_swt.1} parent=39 // pred_check_branch
              %442 = sbr.rel (0) target = $region44
            $region43: #{wavelet_embedding_swt.1} parent=39 // pred_region
              // Predicated region
              $region56: #{wavelet_embedding_swt.1} parent=43 // pred_check
                _
              $region57: #{wavelet_embedding_swt.1} parent=43 // pred_check_branch
                %467 = sbr.rel (0) target = $region59
              $region58: #{wavelet_embedding_swt.1} parent=43 // pred_region
                loop: start=0, step=1, limit=1
                $region60: #{wavelet_embedding_swt.1} parent=58 // loop_pre_header
                  _
                $region61: #{wavelet_embedding_swt.1} parent=58 // loop_header
                  %s469 = sphi 0, %s473
                  %p470 = scmp.ge.s32.totalorder %s469, 1
                  %s474 = sphi %s432, %s432
                  %s475 = sphi %s438, %s438
                $region62: #{wavelet_embedding_swt.1} parent=58 // loop_header_branch
                  %472 = sbr.rel (%p470) target = $region66
                $region63: #{wavelet_embedding_swt.1} parent=58 // loop_body
                  %v476 = vld [vmem:[%s474] sm:$0xff]
                  %477 = vst [vmem:[%s475] sm:$0xff] %v476
                  %v478 = vld [vmem:[%s474 + $0x8] sm:$0xff]
                  %479 = vst [vmem:[%s475 + $0x8] sm:$0xff] %v478
                  %v480 = vld [vmem:[%s474 + $0x10] sm:$0xff]
                  %481 = vst [vmem:[%s475 + $0x20] sm:$0xff] %v480
                  %v482 = vld [vmem:[%s474 + $0x18] sm:$0xff]
                  %483 = vst [vmem:[%s475 + $0x28] sm:$0xff] %v482
                  %v484 = vld [vmem:[%s474 + $0x20] sm:$0xff]
                  %485 = vst [vmem:[%s475 + $0x40] sm:$0xff] %v484
                  %v486 = vld [vmem:[%s474 + $0x28] sm:$0xff]
                  %487 = vst [vmem:[%s475 + $0x48] sm:$0xff] %v486
                $region64: #{wavelet_embedding_swt.1} parent=58 // loop_footer
                  %s473 = sadd.s32 1, %s469
                $region65: #{wavelet_embedding_swt.1} parent=58 // loop_footer_branch
                  %468 = sbr.rel target = $region61
                $region66: #{wavelet_embedding_swt.1} parent=58 // loop_exit
                  _
              $region59: #{wavelet_embedding_swt.1} parent=43 // pred_fallthru
                _
              // Predicated region
              $region67: #{wavelet_embedding_swt.1} parent=43 // pred_check
                _
              $region68: #{wavelet_embedding_swt.1} parent=43 // pred_check_branch
                %489 = sbr.rel target = $region70
              $region69: #{wavelet_embedding_swt.1} parent=43 // pred_region
                _
              $region70: #{wavelet_embedding_swt.1} parent=43 // pred_fallthru
                _
            $region44: #{wavelet_embedding_swt.1} parent=39 // pred_fallthru
              _
            // Predicated region
            $region45: #{wavelet_embedding_swt.1} parent=39 // pred_check
              _
            $region46: #{wavelet_embedding_swt.1} parent=39 // pred_check_branch
              %444 = sbr.rel target = $region48
            $region47: #{wavelet_embedding_swt.1} parent=39 // pred_region
              loop: start=0, step=1, limit=1
              $region49: #{wavelet_embedding_swt.1} parent=47 // loop_pre_header
                _
              $region50: #{wavelet_embedding_swt.1} parent=47 // loop_header
                %s447 = sphi 0, %s451
                %p448 = scmp.ge.s32.totalorder %s447, 1
                %s452 = sphi %s432, %s432
                %s453 = sphi %s438, %s438
              $region51: #{wavelet_embedding_swt.1} parent=47 // loop_header_branch
                %450 = sbr.rel (%p448) target = $region55
              $region52: #{wavelet_embedding_swt.1} parent=47 // loop_body
                %v454 = vld [vmem:[%s452] sm:$0xff]
                %455 = vst [vmem:[%s453] sm:$0xff] %v454
                %v456 = vld [vmem:[%s452 + $0x8] sm:$0xff]
                %457 = vst [vmem:[%s453 + $0x8] sm:$0xff] %v456
                %v458 = vld [vmem:[%s452 + $0x10] sm:$0xff]
                %459 = vst [vmem:[%s453 + $0x20] sm:$0xff] %v458
                %v460 = vld [vmem:[%s452 + $0x18] sm:$0xff]
                %461 = vst [vmem:[%s453 + $0x28] sm:$0xff] %v460
                %v462 = vld [vmem:[%s452 + $0x20] sm:$0xff]
                %463 = vst [vmem:[%s453 + $0x40] sm:$0xff] %v462
                %v464 = vld [vmem:[%s452 + $0x28] sm:$0xff]
                %465 = vst [vmem:[%s453 + $0x48] sm:$0xff] %v464
              $region53: #{wavelet_embedding_swt.1} parent=47 // loop_footer
                %s451 = sadd.s32 1, %s447
              $region54: #{wavelet_embedding_swt.1} parent=47 // loop_footer_branch
                %446 = sbr.rel target = $region50
              $region55: #{wavelet_embedding_swt.1} parent=47 // loop_exit
                _
            $region48: #{wavelet_embedding_swt.1} parent=39 // pred_fallthru
              _
          $region40: #{wavelet_embedding_swt.1} parent=35 // pred_fallthru
            _
          %490 = vnop
        $region36: #{wavelet_embedding_swt.1} parent=31 // pred_fallthru
          _
      $region32: #{wavelet_embedding_swt.1} parent=5 // pred_fallthru
        _
      %p491 = scmp.le.s32.totalorder 2, %s9
      // Predicated region
      $region71: #{wavelet_embedding_swt.1} parent=5 // pred_check
        %p492 = pneg %p491
      $region72: #{wavelet_embedding_swt.1} parent=5 // pred_check_branch
        %494 = sbr.rel (%p492) target = $region74
      $region73: #{wavelet_embedding_swt.1} parent=5 // pred_region
        %s495 = ssub.s32 %s9, 2
        // Predicated region
        $region75: #{wavelet_embedding_swt.1} parent=73 // pred_check
          %p496 = pneg %p116
        $region76: #{wavelet_embedding_swt.1} parent=73 // pred_check_branch
          %498 = sbr.rel (%p496) target = $region78
        $region77: #{wavelet_embedding_swt.1} parent=73 // pred_region
          %s499 = sand.u32 %s101, 1
          %s500 = sand.u32 %s101, 1
          %s501 = smul.addr %s500, 48
          %s502 = scalar_lea.vmem [#allocation2], %s501
        $region78: #{wavelet_embedding_swt.1} parent=73 // pred_fallthru
          _
      $region74: #{wavelet_embedding_swt.1} parent=5 // pred_fallthru
        _
    $region6: #{wavelet_embedding_swt.1} parent=1 // loop_footer
      %s13 = sadd.s32 1, %s9
    $region7: #{wavelet_embedding_swt.1} parent=1 // loop_footer_branch
      %8 = sbr.rel target = $region3
    $region8: #{wavelet_embedding_swt.1} parent=1 // loop_exit
      _

</llo_original>
